<compile_context>
chip_gen: v6e
topology: v6e:2x2x1
jax: 0.10.0
libtpu: 0.0.40
codegen_flags: <defaults>
</compile_context>

<pallas_src>
import functools

import jax
import jax.numpy as jnp
from jax import lax
from jax.experimental import pallas as pl
from jax.experimental.pallas import tpu as pltpu


# ----------------------------- Pallas kernel ------------------------------- #

def _block_kernel(ph_ref, w_ref, o_ref, *, cin, l_out, taps, eps, slope):
    """Fused Conv1d(k=3, pad=1) + InstanceNorm1d + LeakyReLU for one batch sample.

    ph_ref : (1, stride*Cin, NP)  f32  stride-phase de-interleaved padded input
    w_ref  : (Cout, K*Cin)        f32  conv weights, column ordering = k*Cin + ci
    o_ref  : (1, Cout, L_out)     f32  output, already in NCL layout
    """
    ph = ph_ref[0]                                        # (stride*Cin, NP)

    # Conv taps: tap_k[ci, l] = x_pad[ci, l*stride + k] = phase_{k%stride}[ci, l + k//stride]
    # -> static, unit-offset slices of the already-resident VMEM block (no HBM im2col).
    cols = [ph[p * cin:(p + 1) * cin, sh:sh + l_out] for (p, sh) in taps]
    pm = jnp.concatenate(cols, axis=0)                    # (K*Cin, L_out)

    # Conv as a single MXU matmul, f32 accumulation.  (Bias dropped: cancelled by InstanceNorm.)
    acc = jnp.dot(w_ref[...], pm, preferred_element_type=jnp.float32)   # (Cout, L_out)

    # InstanceNorm1d (affine=False): per-channel stats over L.  Lane extent == L_out exactly,
    # so no masking is needed.  Reductions over lanes land on the XLU.
    inv_n = 1.0 / float(l_out)
    mean = jnp.sum(acc, axis=1, keepdims=True) * inv_n    # (Cout, 1)
    cen = acc - mean
    var = jnp.sum(cen * cen, axis=1, keepdims=True) * inv_n
    y = cen * lax.rsqrt(var + eps)                        # EUP rsqrt

    o_ref[0] = jnp.where(y >= 0.0, y, slope * y)          # LeakyReLU(0.2)


# ------------------------------ JAX wrapper -------------------------------- #

def block_forward(x, w, b=None, *, stride, eps=1e-5, negative_slope=0.2):
    """PyTorch `Block` forward.  x: (B, Cin, L) NCL; w: (Cout, Cin, K); b: (Cout,) (unused).

    The Conv1d bias is exactly cancelled by the non-affine InstanceNorm1d that follows, so it
    is dropped (one less input stream + VPU add); `b` is accepted only for API parity.
    """
    del b
    B, C_in, L = x.shape
    C_out, _, K = w.shape
    pad = 1                                              # Conv1d(padding=1)
    L_out = (L + 2 * pad - K) // stride + 1
    assert L_out >= 1

    # --- stride-phase de-interleave (≈1x input bytes; replaces the 3x HBM im2col) ---
    max_shift = (K - 1) // stride
    NP = L_out + max_shift
    x_pad = jnp.pad(x, ((0, 0), (0, 0), (pad, pad)))     # (B, Cin, L+2)
    extra = max(0, NP * stride - (L + 2 * pad))
    if extra:
        x_pad = jnp.pad(x_pad, ((0, 0), (0, 0), (0, extra)))
    phases = [x_pad[:, :, p::stride][:, :, :NP] for p in range(stride)]
    ph = jnp.concatenate(phases, axis=1).astype(jnp.float32)   # (B, stride*Cin, NP)

    # (phase, shift) for each of the K taps, resolved statically.
    taps = tuple((k % stride, k // stride) for k in range(K))

    # --- weights: (Cout, Cin, K) -> (Cout, K*Cin), ordering matches the tap concat ---
    w_mat = jnp.transpose(w, (0, 2, 1)).reshape(C_out, K * C_in).astype(jnp.float32)

    # --- explicit scoped-VMEM budget: double-buffered in/out blocks + weights + slack ---
    ph_blk = 4 * stride * C_in * NP
    out_blk = 4 * C_out * L_out
    w_blk = 4 * C_out * K * C_in
    vmem_limit = int(min(64 * 2**20, max(16 * 2**20, 4 * (ph_blk + out_blk) + 2 * w_blk)))

    kernel = functools.partial(_block_kernel, cin=C_in, l_out=L_out, taps=taps,
                               eps=float(eps), slope=float(negative_slope))
    # Output is produced directly in NCL: no slice, no transpose afterwards.
    out = pl.pallas_call(
        kernel,
        out_shape=jax.ShapeDtypeStruct((B, C_out, L_out), jnp.float32),
        grid=(B,),
        in_specs=[
            pl.BlockSpec((1, stride * C_in, NP), lambda i: (i, 0, 0)),
            pl.BlockSpec((C_out, K * C_in), lambda i: (0, 0)),
        ],
        out_specs=pl.BlockSpec((1, C_out, L_out), lambda i: (i, 0, 0)),
        compiler_params=pltpu.CompilerParams(
            dimension_semantics=("parallel",),
            vmem_limit_bytes=vmem_limit,
        ),
    )(ph, w_mat)
    return out


# ----------------------------- pure-JAX reference --------------------------- #

def reference_block(x, w, b, stride, eps=1e-5, slope=0.2):
    y = lax.conv_general_dilated(
        x, w, window_strides=(stride,), padding=[(1, 1)],
        dimension_numbers=("NCH", "OIH", "NCH"))
    y = y + b[None, :, None]
    mean = jnp.mean(y, axis=-1, keepdims=True)
    var = jnp.mean((y - mean) ** 2, axis=-1, keepdims=True)
    y = (y - mean) / jnp.sqrt(var + eps)
    return jnp.where(y >= 0.0, y, slope * y)


# --------------------------------- main ------------------------------------ #

if __name__ == "__main__":
    IN_CH, OUT_CH, K, STRIDE = 4, 32, 3, 2
    B, L = 2, 16

    key = jax.random.PRNGKey(0)
    kx, kw, kb = jax.random.split(key, 3)
    x = jax.random.normal(kx, (B, IN_CH, L), jnp.float32)
    w = jax.random.normal(kw, (OUT_CH, IN_CH, K), jnp.float32) / jnp.sqrt(IN_CH * K)
    b = jax.random.normal(kb, (OUT_CH,), jnp.float32) * 0.1

    # stride=2 (as in the discriminator's downsampling blocks)
    fwd = jax.jit(functools.partial(block_forward, stride=STRIDE))
    out = jax.block_until_ready(fwd(x, w, b))
    L_out = (L + 2 - K) // STRIDE + 1                    # = 8
    assert out.shape == (B, OUT_CH, L_out), (out.shape, (B, OUT_CH, L_out))
    assert bool(jnp.all(jnp.isfinite(out)))
    ref = reference_block(x, w, b, STRIDE)
    max_err = float(jnp.max(jnp.abs(out - ref)))
    assert jnp.allclose(out, ref, atol=2e-3, rtol=2e-3), max_err

    # stride=1 path (different phase decomposition) sanity check
    fwd1 = jax.jit(functools.partial(block_forward, stride=1))
    out1 = jax.block_until_ready(fwd1(x, w, b))
    ref1 = reference_block(x, w, b, 1)
    assert out1.shape == ref1.shape
    max_err1 = float(jnp.max(jnp.abs(out1 - ref1)))
    assert jnp.allclose(out1, ref1, atol=2e-3, rtol=2e-3), max_err1

    print("KERNEL_OK")
</pallas_src>

<mosaic_0001>
module attributes {stable_mosaic.version = 11 : i64} {
  func.func @_block_kernel(%arg0: i32, %arg1: memref<1x8x9xf32, #tpu.memory_space<vmem>>, %arg2: memref<32x12xf32, #tpu.memory_space<vmem>>, %arg3: memref<1x32x8xf32, #tpu.memory_space<vmem>>) attributes {dimension_semantics = [#tpu.dimension_semantics<parallel>], iteration_bounds = array<i64: 2>, scalar_prefetch = 0 : i64, scratch_operands = 0 : i64, tpu.core_type = #tpu.core_type<tc>, window_params = [{transform_indices = @transform_0, window_bounds = array<i64: 1, 8, 9>}, {pipeline_mode = #tpu.pipeline_mode<synchronous>, transform_indices = @transform_1, window_bounds = array<i64: 32, 12>}, {transform_indices = @transform_2, window_bounds = array<i64: 1, 32, 8>}]} {
    %c0 = arith.constant 0 : index
    %c0_0 = arith.constant 0 : index
    %c0_1 = arith.constant 0 : index
    %0 = vector.load %arg1[%c0, %c0_0, %c0_1] : memref<1x8x9xf32, #tpu.memory_space<vmem>>, vector<1x8x9xf32>
    %1 = vector.shape_cast %0 : vector<1x8x9xf32> to vector<8x9xf32>
    %2 = vector.extract_strided_slice %1 {offsets = [0, 0], sizes = [4, 8], strides = [1, 1]} : vector<8x9xf32> to vector<4x8xf32>
    %3 = vector.extract_strided_slice %1 {offsets = [4, 0], sizes = [4, 8], strides = [1, 1]} : vector<8x9xf32> to vector<4x8xf32>
    %4 = vector.extract_strided_slice %1 {offsets = [0, 1], sizes = [4, 8], strides = [1, 1]} : vector<8x9xf32> to vector<4x8xf32>
    %5 = tpu.concatenate %2, %3, %4 in 0 : vector<4x8xf32>, vector<4x8xf32>, vector<4x8xf32> -> vector<12x8xf32>
    %c0_2 = arith.constant 0 : index
    %c0_3 = arith.constant 0 : index
    %6 = vector.load %arg2[%c0_2, %c0_3] : memref<32x12xf32, #tpu.memory_space<vmem>>, vector<32x12xf32>
    %cst = arith.constant dense<0.000000e+00> : vector<32x8xf32>
    %7 = tpu.matmul %6, %5, %cst {dimension_numbers = #tpu.dot_dimension_numbers<[1], [0], [0], [1], [0, 0, 1, 1], [], []>} : vector<32x12xf32>, vector<12x8xf32>, vector<32x8xf32> -> vector<32x8xf32>
    %cst_4 = arith.constant dense<0.000000e+00> : vector<32xf32>
    %8 = vector.multi_reduction <add>, %7, %cst_4 [1] : vector<32x8xf32> to vector<32xf32>
    %9 = vector.shape_cast %8 : vector<32xf32> to vector<32x1xf32>
    %cst_5 = arith.constant 1.250000e-01 : f32
    %10 = vector.broadcast %cst_5 : f32 to vector<32x1xf32>
    %11 = arith.mulf %9, %10 : vector<32x1xf32>
    %12 = vector.broadcast %11 : vector<32x1xf32> to vector<32x8xf32>
    %13 = arith.subf %7, %12 : vector<32x8xf32>
    %14 = arith.mulf %13, %13 : vector<32x8xf32>
    %cst_6 = arith.constant dense<0.000000e+00> : vector<32xf32>
    %15 = vector.multi_reduction <add>, %14, %cst_6 [1] : vector<32x8xf32> to vector<32xf32>
    %16 = vector.shape_cast %15 : vector<32xf32> to vector<32x1xf32>
    %cst_7 = arith.constant 1.250000e-01 : f32
    %17 = vector.broadcast %cst_7 : f32 to vector<32x1xf32>
    %18 = arith.mulf %16, %17 : vector<32x1xf32>
    %cst_8 = arith.constant 9.99999974E-6 : f32
    %19 = vector.broadcast %cst_8 : f32 to vector<32x1xf32>
    %20 = arith.addf %18, %19 : vector<32x1xf32>
    %21 = math.rsqrt %20 : vector<32x1xf32>
    %22 = vector.broadcast %21 : vector<32x1xf32> to vector<32x8xf32>
    %23 = arith.mulf %13, %22 : vector<32x8xf32>
    %cst_9 = arith.constant 0.000000e+00 : f32
    %24 = vector.broadcast %cst_9 : f32 to vector<32x8xf32>
    %25 = arith.cmpf oge, %23, %24 : vector<32x8xf32>
    %cst_10 = arith.constant 2.000000e-01 : f32
    %26 = vector.broadcast %cst_10 : f32 to vector<32x8xf32>
    %27 = arith.mulf %26, %23 : vector<32x8xf32>
    %28 = arith.select %25, %23, %27 : vector<32x8xi1>, vector<32x8xf32>
    %c0_11 = arith.constant 0 : index
    %c0_12 = arith.constant 0 : index
    %c0_13 = arith.constant 0 : index
    %29 = vector.load %arg3[%c0_11, %c0_12, %c0_13] : memref<1x32x8xf32, #tpu.memory_space<vmem>>, vector<1x32x8xf32>
    %30 = vector.shape_cast %29 : vector<1x32x8xf32> to vector<32x8xf32>
    %31 = vector.shape_cast %28 : vector<32x8xf32> to vector<1x32x8xf32>
    tpu.vector_store %arg3[%c0_11, %c0_12, %c0_13], %31 {strides = array<i32>} : memref<1x32x8xf32, #tpu.memory_space<vmem>>, vector<1x32x8xf32>,
    return
  }
  func.func @transform_0(%arg0: i32) -> (i32, i32, i32) {
    %c0_i32 = arith.constant 0 : i32
    %c0_i32_0 = arith.constant 0 : i32
    %c0_i32_1 = arith.constant 0 : i32
    return %arg0, %c0_i32, %c0_i32_0 : i32, i32, i32
  }
  func.func @transform_1(%arg0: i32) -> (i32, i32) {
    %c0_i32 = arith.constant 0 : i32
    %c0_i32_0 = arith.constant 0 : i32
    %c0_i32_1 = arith.constant 0 : i32
    return %c0_i32, %c0_i32_0 : i32, i32
  }
  func.func @transform_2(%arg0: i32) -> (i32, i32, i32) {
    %c0_i32 = arith.constant 0 : i32
    %c0_i32_0 = arith.constant 0 : i32
    %c0_i32_1 = arith.constant 0 : i32
    return %arg0, %c0_i32, %c0_i32_0 : i32, i32, i32
  }
}

</mosaic_0001>

<llo_original>
// kernel: block_forward.1
$region0: #{block_forward.1}
  #allocation0 [shape = 'u32[]', space=smem, size = 0x4, offset = 0x4, fixed_abs, tag = 'smem constant byte address 0x4 - core index']
  #allocation1 [shape = 'u32[144,128]{1,0:T(1,128)}', space=vmem, size = 0x12000, scoped, tag = 'internal scratch']
  %s0 = inlined_call_operand.vmem [shape: f32[2,8,9], index: 0, kind: input, shape index: {}]
  %s1 = inlined_call_operand.vmem [shape: f32[32,12], index: 1, kind: input, shape index: {}]
  %s2 = inlined_call_operand.vmem [shape: f32[2,32,8], index: 2, kind: output, shape index: {}]
  %s3 = sld [smem:[#allocation0]]
  $region41: #{block_forward.1} parent=0
    _
  %s5 = ssub.s32 1, %s3
  %s6 = scalar_select 0, %s5, %s3
  loop: start=0, step=1, limit=4
  $region2: #{block_forward.1} parent=0 // loop_pre_header
    _
  $region3: #{block_forward.1} parent=0 // loop_header
    %s8 = sphi 0, %s12
    %p9 = scmp.ge.s32.totalorder %s8, 4
    %s18 = sphi 0, %s20
    %s21 = sphi 0, %s18
    %s22 = sphi 0, %s21
    %s38 = sphi 0, %s22
    %s42 = sphi 0, %s42
    %s44 = sphi 0, %s42
    %s45 = sphi 0, %s44
    %s59 = sphi 0, %s45
    %s65 = sphi 0, %s67
    %s68 = sphi 0, %s65
    %s69 = sphi 0, %s68
    %s85 = sphi 0, %s69
  $region4: #{block_forward.1} parent=0 // loop_header_branch
    %11 = sbr.rel (%p9) target = $region8
  $region5: #{block_forward.1} parent=0 // loop_body
    %s13 = ssub.s32 %s8, 1
    %s14 = ssub.s32 %s8, 2
    %s15 = sadd.s32 %s8, 1
    %s16 = ssub.s32 %s8, %s15
    %p17 = scmp.eq.s32.totalorder %s16, 0
    %s19 = sadd.s32 %s18, 1
    %s20 = scalar_select %p17, %s18, %s19
    %p23 = pneg %p17
    %p24 = scmp.eq.s32.totalorder %s8, 1
    %p25 = por %p23, %p24
    %p26 = scmp.ne.s32.totalorder %s18, %s21
    %p27 = scmp.eq.s32.totalorder %s8, 0
    %p28 = por %p26, %p27
    %p29 = scmp.ne.s32.totalorder %s18, %s21
    %p30 = scmp.eq.s32.totalorder %s13, 1
    %p31 = por %p29, %p30
    %p32 = scmp.ne.s32.totalorder %s21, %s22
    %p33 = scmp.eq.s32.totalorder %s13, 0
    %p34 = por %p32, %p33
    %p35 = scmp.ne.s32.totalorder %s21, %s22
    %p36 = scmp.eq.s32.totalorder %s14, 1
    %p37 = por %p35, %p36
    %p39 = scmp.ne.s32.totalorder %s22, %s38
    %p40 = scmp.eq.s32.totalorder %s14, 0
    %p41 = por %p39, %p40
    %s43 = sadd.s32 %s42, 1
    %p46 = scmp.eq.s32.totalorder %s8, 1
    %p47 = scmp.ne.s32.totalorder %s42, %s44
    %p48 = scmp.eq.s32.totalorder %s8, 0
    %p49 = por %p47, %p48
    %p50 = scmp.ne.s32.totalorder %s42, %s44
    %p51 = scmp.eq.s32.totalorder %s13, 1
    %p52 = por %p50, %p51
    %p53 = scmp.ne.s32.totalorder %s44, %s45
    %p54 = scmp.eq.s32.totalorder %s13, 0
    %p55 = por %p53, %p54
    %p56 = scmp.ne.s32.totalorder %s44, %s45
    %p57 = scmp.eq.s32.totalorder %s14, 1
    %p58 = por %p56, %p57
    %p60 = scmp.ne.s32.totalorder %s45, %s59
    %p61 = scmp.eq.s32.totalorder %s14, 0
    %p62 = por %p60, %p61
    %s63 = ssub.s32 %s8, %s15
    %p64 = scmp.eq.s32.totalorder %s63, 0
    %s66 = sadd.s32 %s65, 1
    %s67 = scalar_select %p64, %s65, %s66
    %p70 = pneg %p64
    %p71 = scmp.eq.s32.totalorder %s8, 1
    %p72 = por %p70, %p71
    %p73 = scmp.ne.s32.totalorder %s65, %s68
    %p74 = scmp.eq.s32.totalorder %s8, 0
    %p75 = por %p73, %p74
    %p76 = scmp.ne.s32.totalorder %s65, %s68
    %p77 = scmp.eq.s32.totalorder %s13, 1
    %p78 = por %p76, %p77
    %p79 = scmp.ne.s32.totalorder %s68, %s69
    %p80 = scmp.eq.s32.totalorder %s13, 0
    %p81 = por %p79, %p80
    %p82 = scmp.ne.s32.totalorder %s68, %s69
    %p83 = scmp.eq.s32.totalorder %s14, 1
    %p84 = por %p82, %p83
    %p86 = scmp.ne.s32.totalorder %s69, %s85
    %p87 = scmp.eq.s32.totalorder %s14, 0
    %p88 = por %p86, %p87
    %p89 = scmp.le.s32.totalorder 1, %s8
    %p90 = scmp.lt.s32.totalorder %s8, 3
    %p91 = pnand %p89, %p90
    %p92 = pneg %p91
    // Predicated region
    $region9: #{block_forward.1} parent=5 // pred_check
      _
    $region10: #{block_forward.1} parent=5 // pred_check_branch
      %94 = sbr.rel (%p91) target = $region12
    $region11: #{block_forward.1} parent=5 // pred_region
      %s95 = ssub.s32 %s8, 1
      // Predicated region
      $region13: #{block_forward.1} parent=11 // pred_check
        %p96 = pneg %p55
      $region14: #{block_forward.1} parent=11 // pred_check_branch
        %98 = sbr.rel (%p96) target = $region16
      $region15: #{block_forward.1} parent=11 // pred_region
        _
      $region16: #{block_forward.1} parent=11 // pred_fallthru
        _
    $region12: #{block_forward.1} parent=5 // pred_fallthru
      _
    %p99 = scmp.lt.s32.totalorder %s8, 2
    // Predicated region
    $region17: #{block_forward.1} parent=5 // pred_check
      %p100 = pneg %p99
    $region18: #{block_forward.1} parent=5 // pred_check_branch
      %102 = sbr.rel (%p100) target = $region20
    $region19: #{block_forward.1} parent=5 // pred_region
      // Predicated region
      $region21: #{block_forward.1} parent=19 // pred_check
        %p103 = pneg %p28
      $region22: #{block_forward.1} parent=19 // pred_check_branch
        %105 = sbr.rel (%p103) target = $region24
      $region23: #{block_forward.1} parent=19 // pred_region
        %p106 = scmp.lt.s32.totalorder %s8, 1
        %s107 = scalar_select %p106, %s8, 1
        %s108 = smul.addr %s107, 8
        %s109 = scalar_lea.vmem %s0, %s108
      $region24: #{block_forward.1} parent=19 // pred_fallthru
        _
    $region20: #{block_forward.1} parent=5 // pred_fallthru
      _
    %p110 = scmp.le.s32.totalorder 1, %s8
    %p111 = scmp.lt.s32.totalorder %s8, 3
    %p112 = pnand %p110, %p111
    %p113 = pneg %p112
    // Predicated region
    $region25: #{block_forward.1} parent=5 // pred_check
      _
    $region26: #{block_forward.1} parent=5 // pred_check_branch
      %115 = sbr.rel (%p112) target = $region28
    $region27: #{block_forward.1} parent=5 // pred_region
      %s116 = ssub.s32 %s8, 1
      %p117 = scmp.lt.s32.totalorder %s13, 1
      %s118 = scalar_select %p117, %s13, 1
      %s119 = smul.addr %s118, 8
      %s120 = scalar_lea.vmem %s0, %s119
      %p121 = pneg %p34
      %p122 = pneg %p31
      %p123 = pneg %p55
      %p124 = pneg %p52
      %p125 = pneg %p81
      %p126 = pneg %p78
      %p127 = scmp.lt.s32.totalorder %s13, 1
      %s128 = scalar_select %p127, %s13, 1
      %s129 = smul.addr %s128, 4
      %s130 = smul.addr %s129, 8
      %s131 = scalar_lea.vmem %s2, %s130
      %p132 = scmp.lt.s32.totalorder %s13, 1
      %s133 = scalar_select %p132, %s13, 1
      %s134 = smul.addr %s133, 8
      %s135 = scalar_lea.vmem %s0, %s134
      %p136 = scmp.lt.s32.totalorder %s13, 1
      %s137 = scalar_select %p136, %s13, 1
      %s138 = smul.addr %s137, 4
      %s139 = smul.addr %s138, 8
      %s140 = scalar_lea.vmem %s2, %s139
      %v141 = vld [vmem:[%s135] sm:$0xff]
      %143 = vrot.lane.b32.xlu0 %v141, 127
      %v144 = vpop.permute.xlu0 %143
      %v145 = vld [vmem:[%s1] sm:$0xff]
      %v146 = vld [vmem:[%s1 + $0x8] sm:$0xff]
      %v147 = vld [vmem:[%s1 + $0x10] sm:$0xff]
      %v148 = vld [vmem:[%s1 + $0x18] sm:$0xff]
      %vm149 = vcmask 97280
      %v151 = vsel %vm149, %v145, 0
      %v154 = vsel %vm149, %v146, 0
      %v157 = vsel %vm149, %v147, 0
      %v160 = vsel %vm149, %v148, 0
      %vm162 = vcmask 1043456
      %v163 = vsel %vm162, %v144, 0
      %165 = vmatprep.subr.mxu0 0.0
      %166 = vmatpush1.msra.mxu0 0.0
      %167 = vmatprep.subr.mxu0 0.0
      %168 = vmatpush1.msra.mxu0 0.0
      %169 = vmatprep.subr.mxu0 0.0
      %170 = vmatpush1.msra.mxu0 0.0
      %171 = vmatprep.subr.mxu0 0.0
      %172 = vmatpush1.msra.mxu0 0.0
      %173 = vmatprep.subr.mxu0 0.0
      %174 = vmatpush1.msra.mxu0 0.0
      %175 = vmatprep.subr.mxu0 0.0
      %176 = vmatpush1.msra.mxu0 0.0
      %177 = vmatprep.subr.mxu0 0.0
      %178 = vmatpush1.msra.mxu0 0.0
      %179 = vmatprep.subr.mxu0 0.0
      %180 = vmatpush1.msra.mxu0 0.0
      %181 = vmatprep.subr.mxu0 0.0
      %182 = vmatpush1.msra.mxu0 0.0
      %183 = vmatprep.subr.mxu0 0.0
      %184 = vmatpush1.msra.mxu0 0.0
      %185 = vmatprep.subr.mxu0 0.0
      %186 = vmatpush1.msra.mxu0 0.0
      %187 = vmatprep.subr.mxu0 0.0
      %188 = vmatpush1.msra.mxu0 0.0
      %189 = vmatprep.subr.mxu0 0.0
      %190 = vmatpush1.msra.mxu0 0.0
      %191 = vmatprep.subr.mxu0 0.0
      %192 = vmatpush1.msra.mxu0 0.0
      %193 = vmatprep.subr.mxu0 0.0
      %194 = vmatpush1.msra.mxu0 %v163
      %195 = vmatprep.subr.mxu0 0.0
      %196 = vmatpush1.msra.mxu0 %v141
      %197 = vmatprep.subr.mxu0 0.0
      %198 = vmatpush2.msra.mxu0 0.0
      %199 = vmatprep.subr.mxu0 0.0
      %200 = vmatpush2.msra.mxu0 0.0
      %201 = vmatprep.subr.mxu0 0.0
      %202 = vmatpush2.msra.mxu0 0.0
      %203 = vmatprep.subr.mxu0 0.0
      %204 = vmatpush2.msra.mxu0 0.0
      %205 = vmatprep.subr.mxu0 0.0
      %206 = vmatpush2.msra.mxu0 0.0
      %207 = vmatprep.subr.mxu0 0.0
      %208 = vmatpush2.msra.mxu0 0.0
      %209 = vmatprep.subr.mxu0 0.0
      %210 = vmatpush2.msra.mxu0 0.0
      %211 = vmatprep.subr.mxu0 0.0
      %212 = vmatpush2.msra.mxu0 0.0
      %213 = vmatprep.subr.mxu0 0.0
      %214 = vmatpush2.msra.mxu0 0.0
      %215 = vmatprep.subr.mxu0 0.0
      %216 = vmatpush2.msra.mxu0 0.0
      %217 = vmatprep.subr.mxu0 0.0
      %218 = vmatpush2.msra.mxu0 0.0
      %219 = vmatprep.subr.mxu0 0.0
      %220 = vmatpush2.msra.mxu0 0.0
      %221 = vmatprep.subr.mxu0 0.0
      %222 = vmatpush2.msra.mxu0 0.0
      %223 = vmatprep.subr.mxu0 0.0
      %224 = vmatpush2.msra.mxu0 0.0
      %225 = vmatprep.subr.mxu0 0.0
      %226 = vmatpush2.msra.mxu0 0.0
      %227 = vmatprep.subr.mxu0 0.0
      %228 = vmatpush2.msra.mxu0 0.0
      %229 = vmatprep.mubr.f32.mxu0 0.0
      %230 = vmatmul.mubr.f32.gmra.mxu0 %v151
      %v231 = vpop.f32.mrf.mxu0
      %v232 = vadd.f32 0.0, %v231
      %v233 = vpop.f32.mrf.mxu0
      %234 = vmatprep.mubr.f32.mxu0 0.0
      %235 = vmatmul.mubr.f32.gmra.mxu0 %v154
      %v236 = vpop.f32.mrf.mxu0
      %v237 = vadd.f32 0.0, %v236
      %v238 = vpop.f32.mrf.mxu0
      %239 = vmatprep.mubr.f32.mxu0 0.0
      %240 = vmatmul.mubr.f32.gmra.mxu0 %v157
      %v241 = vpop.f32.mrf.mxu0
      %v242 = vadd.f32 0.0, %v241
      %v243 = vpop.f32.mrf.mxu0
      %244 = vmatprep.mubr.f32.mxu0 0.0
      %245 = vmatmul.mubr.f32.gmra.mxu0 %v160
      %v246 = vpop.f32.mrf.mxu0
      %v247 = vadd.f32 0.0, %v246
      %v248 = vpop.f32.mrf.mxu0
      %249 = vdwg.mxu0
      %vm250 = vcmask 64512
      %v251 = vsel %vm250, %v232, 0.0
      %252 = vadd.xlane.f32.xlu0 %v251
      %v253 = vpop.xlane.xlu0 %252
      %v254 = vsel %vm250, %v237, 0.0
      %255 = vadd.xlane.f32.xlu0 %v254
      %v256 = vpop.xlane.xlu0 %255
      %v257 = vsel %vm250, %v242, 0.0
      %258 = vadd.xlane.f32.xlu0 %v257
      %v259 = vpop.xlane.xlu0 %258
      %v260 = vsel %vm250, %v247, 0.0
      %261 = vadd.xlane.f32.xlu0 %v260
      %v262 = vpop.xlane.xlu0 %261
      %v263 = vmul.f32 %v253, 0.125
      %v264 = vmul.f32 %v256, 0.125
      %v265 = vmul.f32 %v259, 0.125
      %v266 = vmul.f32 %v262, 0.125
      %v267 = vsub.f32 %v232, %v263
      %v268 = vsub.f32 %v237, %v264
      %v269 = vsub.f32 %v242, %v265
      %v270 = vsub.f32 %v247, %v266
      %v271 = vmul.f32 %v267, %v267
      %v272 = vmul.f32 %v268, %v268
      %v273 = vmul.f32 %v269, %v269
      %v274 = vmul.f32 %v270, %v270
      %v275 = vsel %vm250, %v271, 0.0
      %276 = vadd.xlane.f32.xlu0 %v275
      %v277 = vpop.xlane.xlu0 %276
      %v278 = vsel %vm250, %v272, 0.0
      %279 = vadd.xlane.f32.xlu0 %v278
      %v280 = vpop.xlane.xlu0 %279
      %v281 = vsel %vm250, %v273, 0.0
      %282 = vadd.xlane.f32.xlu0 %v281
      %v283 = vpop.xlane.xlu0 %282
      %v284 = vsel %vm250, %v274, 0.0
      %285 = vadd.xlane.f32.xlu0 %v284
      %v286 = vpop.xlane.xlu0 %285
      %v287 = vmul.f32 %v277, 0.125
      %v288 = vmul.f32 %v280, 0.125
      %v289 = vmul.f32 %v283, 0.125
      %v290 = vmul.f32 %v286, 0.125
      %v291 = vadd.f32 %v287, 1e-05
      %v292 = vadd.f32 %v288, 1e-05
      %v293 = vadd.f32 %v289, 1e-05
      %v294 = vadd.f32 %v290, 1e-05
      %v295 = vrsqrt.pop %v291
      %v296 = vrsqrt.pop %v292
      %v297 = vrsqrt.pop %v293
      %v298 = vrsqrt.pop %v294
      %v299 = vmul.f32 %v267, %v295
      %v300 = vmul.f32 %v268, %v296
      %v301 = vmul.f32 %v269, %v297
      %v302 = vmul.f32 %v270, %v298
      %vm303 = vcmp.ge.f32.partialorder %v299, 0.0
      %vm304 = vcmp.ge.f32.partialorder %v300, 0.0
      %vm305 = vcmp.ge.f32.partialorder %v301, 0.0
      %vm306 = vcmp.ge.f32.partialorder %v302, 0.0
      %v307 = vmul.f32 %v299, 0.2
      %v308 = vmul.f32 %v300, 0.2
      %v309 = vmul.f32 %v301, 0.2
      %v310 = vmul.f32 %v302, 0.2
      %v311 = vsel %vm303, %v299, %v307
      %v312 = vsel %vm304, %v300, %v308
      %v313 = vsel %vm305, %v301, %v309
      %v314 = vsel %vm306, %v302, %v310
      %315 = vst.msk [vmem:[%s140] sm:$0xff] %vm250, %v311
      %316 = vst.msk [vmem:[%s140 + $0x8] sm:$0xff] %vm250, %v312
      %317 = vst.msk [vmem:[%s140 + $0x10] sm:$0xff] %vm250, %v313
      %318 = vst.msk [vmem:[%s140 + $0x18] sm:$0xff] %vm250, %v314
      %p319 = scmp.lt.s32.totalorder %s13, 1
      %s320 = scalar_select %p319, %s13, 1
      %s321 = smul.addr %s320, 4
      %s322 = smul.addr %s321, 8
      %s323 = scalar_lea.vmem %s2, %s322
      // Predicated region
      $region29: #{block_forward.1} parent=27 // pred_check
        %p324 = pneg %p78
      $region30: #{block_forward.1} parent=27 // pred_check_branch
        %326 = sbr.rel (%p324) target = $region32
      $region31: #{block_forward.1} parent=27 // pred_region
        _
      $region32: #{block_forward.1} parent=27 // pred_fallthru
        _
    $region28: #{block_forward.1} parent=5 // pred_fallthru
      _
    %p327 = scmp.le.s32.totalorder 2, %s8
    // Predicated region
    $region33: #{block_forward.1} parent=5 // pred_check
      %p328 = pneg %p327
    $region34: #{block_forward.1} parent=5 // pred_check_branch
      %330 = sbr.rel (%p328) target = $region36
    $region35: #{block_forward.1} parent=5 // pred_region
      %s331 = ssub.s32 %s8, 2
      // Predicated region
      $region37: #{block_forward.1} parent=35 // pred_check
        %p332 = pneg %p84
      $region38: #{block_forward.1} parent=35 // pred_check_branch
        %334 = sbr.rel (%p332) target = $region40
      $region39: #{block_forward.1} parent=35 // pred_region
        %p335 = scmp.lt.s32.totalorder %s14, 1
        %s336 = scalar_select %p335, %s14, 1
        %s337 = smul.addr %s336, 4
        %s338 = smul.addr %s337, 8
        %s339 = scalar_lea.vmem %s2, %s338
      $region40: #{block_forward.1} parent=35 // pred_fallthru
        _
    $region36: #{block_forward.1} parent=5 // pred_fallthru
      _
  $region6: #{block_forward.1} parent=0 // loop_footer
    %s12 = sadd.s32 1, %s8
  $region7: #{block_forward.1} parent=0 // loop_footer_branch
    %7 = sbr.rel target = $region3
  $region8: #{block_forward.1} parent=0 // loop_exit
    _

</llo_original>
